<compile_context>
chip_gen: v7x
topology: tpu7x:2x2x1
jax: 0.10.0
libtpu: 0.0.40
codegen_flags: <defaults>
</compile_context>

<pallas_src>
import functools
import math

import jax
import jax.numpy as jnp
from jax.experimental import pallas as pl
from jax.experimental.pallas import tpu as pltpu


def _round_up(x, m):
    return ((x + m - 1) // m) * m


def _vmem_capacity_bytes():
    """Per-TensorCore VMEM capacity; conservative fallback if unavailable."""
    try:
        info = pltpu.get_tpu_info()
        cap = getattr(info, "vmem_capacity_bytes", None)
        if cap:
            return int(cap)
    except Exception:
        pass
    return 64 * 1024 * 1024  # v7x per-TC size (smallest current generation)


def _row_tile(n_rows, per_row_bytes, tile_budget, block_rows):
    """Pick a row-tile: VMEM-cap by default, >=4 grid steps for megacore,
    ~1 MiB per-step traffic floor so DMA dominates the fixed step overhead."""
    if block_rows is not None:
        tr = max(8, (int(block_rows) // 8) * 8)
    else:
        cap = max(8, (tile_budget // per_row_bytes) // 8 * 8)
        floor = max(8, _round_up(max(1, (1 << 20) // per_row_bytes), 8))
        quarter = _round_up(pl.cdiv(n_rows, 4), 8)
        tr = min(cap, max(floor, quarter))
    if tr >= n_rows:
        return n_rows, (1,)           # single full block (full-dim block is legal)
    return tr, (pl.cdiv(n_rows, tr),)


def _t2v_packed_kernel(tau_ref, wp_ref, b_ref, out_ref, *, out_features):
    """One (TR, L) tile of the lane-packed output, L = g * out_features."""
    tau = tau_ref[...].astype(jnp.float32)            # (TR, g*F)
    wp = wp_ref[...].astype(jnp.float32)              # (g*F, L) = kron(I_g, [w|w0])
    if tau.shape[-1] == 1:
        z = tau * wp                                  # outer product -> pure VPU
    else:
        z = jnp.dot(tau, wp, preferred_element_type=jnp.float32)   # MXU
    z = z + b_ref[...].astype(jnp.float32)            # (1, L) or (TR, L)
    # Lane l holds output column (l % out_features); last column stays linear.
    col = jax.lax.broadcasted_iota(jnp.int32, (1, z.shape[-1]), 1) % out_features
    out_ref[...] = jnp.where(col < out_features - 1, jnp.sin(z), z).astype(out_ref.dtype)


def _t2v_natural_kernel(tau_ref, w_ref, b_ref, out_ref, *, out_features):
    """Fallback: one (TR, out_features) tile in the natural (B, out) layout."""
    tau = tau_ref[...].astype(jnp.float32)            # (TR, F)
    w = w_ref[...].astype(jnp.float32)                # (F, out)
    z = jnp.dot(tau, w, preferred_element_type=jnp.float32)
    z = z + b_ref[...].astype(jnp.float32)            # (1, out) or (TR, out)
    col = jax.lax.broadcasted_iota(jnp.int32, (1, out_features), 1)
    out_ref[...] = jnp.where(col < out_features - 1, jnp.sin(z), z).astype(out_ref.dtype)


def sine_activation(tau, w, b, w0, b0, *, block_rows=None):
    """Time2Vec sine activation.

    tau: (B, F); w, b: (F, out_features - 1); w0, b0: (F, 1).
    Returns jnp.squeeze of the (B, out_features) result (mirrors torch).
    `block_rows` optionally overrides the output row-tile (in packed rows).
    """
    B, F = tau.shape
    out_features = w.shape[1] + 1
    out_dtype = jnp.result_type(tau.dtype, w.dtype)
    out_itemsize = jnp.dtype(out_dtype).itemsize
    tau_itemsize = jnp.dtype(tau.dtype).itemsize

    # torch's `tau @ w + b` broadcasts (B, out-1) + (F, out-1): only defined
    # for F == 1 (standard Time2Vec) or F == B (per-row bias).
    if F != 1 and F != B:
        raise ValueError(
            f"torch bias broadcast undefined for in_features={F}, batch={B}")

    # Parameter prep (tiny, once per call).
    w_cat = jnp.concatenate([w, w0], axis=1).astype(out_dtype)     # (F, out)
    b_cat = jnp.concatenate([b, b0], axis=1).astype(out_dtype)     # (F, out)

    vmem_cap = _vmem_capacity_bytes()
    tile_budget = max(1 << 20, vmem_cap // 16)   # bytes of traffic per grid step

    # Lane packing factor: g batch rows per output row so lane width L = g*out
    # is a multiple of 128 -> unmasked full-lane stores AND a free row-major
    # reshape back to (B, out) (no transpose, no extra HBM pass).
    g = 128 // math.gcd(out_features, 128)
    L = g * out_features
    gF = g * F
    wp_bytes = gF * L * out_itemsize
    use_packed = (wp_bytes <= (4 << 20)) and (gF <= 2048)

    logical_flops = 2 * B * F * out_features + B * out_features
    transcendentals = B * max(out_features - 1, 0)

    if use_packed:
        # -------------------- packed (primary) path ------------------------
        B_g = _round_up(B, g)
        tau_p = tau if B_g == B else jnp.pad(tau, ((0, B_g - B), (0, 0)))  # tiny
        R = B_g // g
        tau_rs = tau_p.reshape(R, gF)                   # free row-major reshape

        # Wp[j*F + f, j*out + o] = w_cat[f, o]  (block diagonal).
        wp = jnp.kron(jnp.eye(g, dtype=out_dtype), w_cat)          # (g*F, L)

        if F == 1:
            bias = jnp.tile(b_cat, (1, g))                          # (1, L)
            bias_blocked = False
        else:  # F == B: per-row bias, packed exactly like the output
            b_p = b_cat if B_g == B else jnp.pad(b_cat, ((0, B_g - B), (0, 0)))
            bias = b_p.reshape(R, L)
            bias_blocked = True

        per_row_bytes = L * 4 + gF * 4 + (L * 4 if bias_blocked else 0)
        tr, grid = _row_tile(R, per_row_bytes, tile_budget, block_rows)

        out_tile = tr * L * out_itemsize
        tau_tile = tr * gF * tau_itemsize
        bias_tile = (tr if bias_blocked else 1) * L * out_itemsize
        needed = 2 * (out_tile + tau_tile + bias_tile) + wp_bytes + (2 << 20)
        vmem_limit = int(min(vmem_cap * 3 // 4, max(needed, 16 << 20)))

        if bias_blocked:
            b_spec = pl.BlockSpec((tr, L), lambda i: (i, 0))
        else:
            b_spec = pl.BlockSpec((1, L), lambda i: (0, 0))

        cost = pl.CostEstimate(
            flops=logical_flops,
            transcendentals=transcendentals,
            bytes_accessed=(tau.size * tau_itemsize
                            + (wp.size + bias.size) * out_itemsize
                            + B * out_features * out_itemsize),
        )

        out_packed = pl.pallas_call(
            functools.partial(_t2v_packed_kernel, out_features=out_features),
            out_shape=jax.ShapeDtypeStruct((R, L), out_dtype),
            grid=grid,
            in_specs=[
                pl.BlockSpec((tr, gF), lambda i: (i, 0)),   # tau rows (natural)
                pl.BlockSpec((gF, L), lambda i: (0, 0)),    # packed [w | w0]
                b_spec,                                     # packed [b | b0]
            ],
            out_specs=pl.BlockSpec((tr, L), lambda i: (i, 0)),
            compiler_params=pltpu.CompilerParams(
                dimension_semantics=("parallel",),          # megacore on v7x
                vmem_limit_bytes=vmem_limit),
            cost_estimate=cost,
        )(tau_rs, wp, bias)

        out = out_packed.reshape(B_g, out_features)         # free reshape
        if B_g != B:
            out = out[:B]
        return jnp.squeeze(out)

    # -------------------- fallback (natural layout) path -------------------
    # Rare: packing table would be too large.  Still no wrapper transposes;
    # tau read natively, output written directly in (B, out) layout.
    bias_blocked = (F != 1)
    bias = b_cat                                            # (1,out) or (B,out)

    per_row_bytes = out_features * 4 + F * 4 + (out_features * 4 if bias_blocked else 0)
    tr, grid = _row_tile(B, per_row_bytes, tile_budget, block_rows)

    out_tile = tr * out_features * out_itemsize
    tau_tile = tr * F * tau_itemsize
    bias_tile = (tr if bias_blocked else 1) * out_features * out_itemsize
    needed = 2 * (out_tile + tau_tile + bias_tile) \
        + F * out_features * out_itemsize + (2 << 20)
    vmem_limit = int(min(vmem_cap * 3 // 4, max(needed, 16 << 20)))

    if bias_blocked:
        b_spec = pl.BlockSpec((tr, out_features), lambda i: (i, 0))
    else:
        b_spec = pl.BlockSpec((1, out_features), lambda i: (0, 0))

    cost = pl.CostEstimate(
        flops=logical_flops,
        transcendentals=transcendentals,
        bytes_accessed=(tau.size * tau_itemsize
                        + (w_cat.size + bias.size) * out_itemsize
                        + B * out_features * out_itemsize),
    )

    out = pl.pallas_call(
        functools.partial(_t2v_natural_kernel, out_features=out_features),
        out_shape=jax.ShapeDtypeStruct((B, out_features), out_dtype),
        grid=grid,
        in_specs=[
            pl.BlockSpec((tr, F), lambda i: (i, 0)),        # tau rows (natural)
            pl.BlockSpec((F, out_features), lambda i: (0, 0)),
            b_spec,
        ],
        out_specs=pl.BlockSpec((tr, out_features), lambda i: (i, 0)),
        compiler_params=pltpu.CompilerParams(
            dimension_semantics=("parallel",),
            vmem_limit_bytes=vmem_limit),
        cost_estimate=cost,
    )(tau, w_cat, bias)
    return jnp.squeeze(out)


if __name__ == "__main__":
    key = jax.random.PRNGKey(0)
    keys = jax.random.split(key, 6)

    def make_params(k, in_features, out_features):
        kw, kb, kw0, kb0 = jax.random.split(k, 4)
        w = jax.random.normal(kw, (in_features, out_features - 1), jnp.float32)
        b = jax.random.normal(kb, (in_features, out_features - 1), jnp.float32)
        w0 = jax.random.normal(kw0, (in_features, 1), jnp.float32)
        b0 = jax.random.normal(kb0, (in_features, 1), jnp.float32)
        return w, b, w0, b0

    def ref_fn(t, w, b, w0, b0):
        v1 = jnp.sin(t @ w + b)
        v2 = t @ w0 + b0
        return jnp.squeeze(jnp.concatenate([v1, v2], axis=1))

    # 1) Standard Time2Vec: in_features=1, out_features=32 (packed, single tile).
    w, b, w0, b0 = make_params(keys[0], 1, 32)
    tau = jax.random.normal(keys[1], (8, 1), dtype=jnp.float32)
    out = jax.block_until_ready(sine_activation(tau, w, b, w0, b0))
    ref = ref_fn(tau, w, b, w0, b0)
    assert out.shape == ref.shape == (8, 32)
    assert jnp.allclose(out, ref, atol=1e-5, rtol=1e-5)

    # 2) Multi-tile + uneven last tile: B=300 -> 75 packed rows, block_rows=16.
    tau2 = jax.random.normal(keys[2], (300, 1), dtype=jnp.float32)
    out2 = jax.block_until_ready(sine_activation(tau2, w, b, w0, b0, block_rows=16))
    ref2 = ref_fn(tau2, w, b, w0, b0)
    assert out2.shape == ref2.shape == (300, 32)
    assert jnp.allclose(out2, ref2, atol=1e-5, rtol=1e-5)

    # 3) out_features not dividing 128 and F == B > 1 (torch per-row bias broadcast).
    w3, b3, w30, b30 = make_params(keys[3], 4, 24)
    tau3 = jax.random.normal(keys[4], (4, 4), dtype=jnp.float32)
    out3 = jax.block_until_ready(sine_activation(tau3, w3, b3, w30, b30))
    ref3 = ref_fn(tau3, w3, b3, w30, b30)
    assert out3.shape == ref3.shape == (4, 24)
    assert jnp.allclose(out3, ref3, atol=1e-5, rtol=1e-5)

    print("KERNEL_OK")
</pallas_src>

<mosaic_0001>
module attributes {stable_mosaic.version = 11 : i64} {
  func.func @_t2v_packed_kernel(%arg0: i32, %arg1: memref<2x4xf32, #tpu.memory_space<vmem>>, %arg2: memref<4x128xf32, #tpu.memory_space<vmem>>, %arg3: memref<1x128xf32, #tpu.memory_space<vmem>>, %arg4: memref<2x128xf32, #tpu.memory_space<vmem>>) attributes {dimension_semantics = [#tpu.dimension_semantics<parallel>], iteration_bounds = array<i64: 1>, scalar_prefetch = 0 : i64, scratch_operands = 0 : i64, tpu.core_type = #tpu.core_type<tc>, window_params = [{transform_indices = @transform_0, window_bounds = array<i64: 2, 4>}, {pipeline_mode = #tpu.pipeline_mode<synchronous>, transform_indices = @transform_1, window_bounds = array<i64: 4, 128>}, {pipeline_mode = #tpu.pipeline_mode<synchronous>, transform_indices = @transform_2, window_bounds = array<i64: 1, 128>}, {transform_indices = @transform_3, window_bounds = array<i64: 2, 128>}]} {
    %c0 = arith.constant 0 : index
    %c0_0 = arith.constant 0 : index
    %0 = vector.load %arg1[%c0, %c0_0] : memref<2x4xf32, #tpu.memory_space<vmem>>, vector<2x4xf32>
    %c0_1 = arith.constant 0 : index
    %c0_2 = arith.constant 0 : index
    %1 = vector.load %arg2[%c0_1, %c0_2] : memref<4x128xf32, #tpu.memory_space<vmem>>, vector<4x128xf32>
    %cst = arith.constant dense<0.000000e+00> : vector<2x128xf32>
    %2 = tpu.matmul %0, %1, %cst {dimension_numbers = #tpu.dot_dimension_numbers<[1], [0], [0], [1], [0, 0, 1, 1], [], []>} : vector<2x4xf32>, vector<4x128xf32>, vector<2x128xf32> -> vector<2x128xf32>
    %c0_3 = arith.constant 0 : index
    %c0_4 = arith.constant 0 : index
    %3 = vector.load %arg3[%c0_3, %c0_4] : memref<1x128xf32, #tpu.memory_space<vmem>>, vector<1x128xf32>
    %4 = vector.broadcast %3 : vector<1x128xf32> to vector<2x128xf32>
    %5 = arith.addf %2, %4 : vector<2x128xf32>
    %6 = tpu.iota {dimensions = array<i32: 1>} : vector<1x128xi32>
    %c32_i32 = arith.constant 32 : i32
    %c0_i32 = arith.constant 0 : i32
    %7 = arith.cmpi eq, %c32_i32, %c0_i32 : i32
    %c1_i32 = arith.constant 1 : i32
    %8 = arith.select %7, %c1_i32, %c32_i32 : i32
    %9 = vector.broadcast %8 : i32 to vector<1x128xi32>
    %10 = arith.remsi %6, %9 : vector<1x128xi32>
    %c0_i32_5 = arith.constant 0 : i32
    %11 = vector.broadcast %c0_i32_5 : i32 to vector<1x128xi32>
    %12 = arith.cmpi ne, %10, %11 : vector<1x128xi32>
    %c0_i32_6 = arith.constant 0 : i32
    %13 = vector.broadcast %c0_i32_6 : i32 to vector<1x128xi32>
    %14 = arith.cmpi slt, %10, %13 : vector<1x128xi32>
    %c0_i32_7 = arith.constant 0 : i32
    %15 = arith.cmpi slt, %8, %c0_i32_7 : i32
    %16 = vector.broadcast %15 : i1 to vector<1x128xi1>
    %17 = vector.broadcast %16 : vector<1x128xi1> to vector<1x128xi1>
    %18 = arith.xori %14, %17 : vector<1x128xi1>
    %19 = arith.andi %18, %12 : vector<1x128xi1>
    %20 = vector.broadcast %8 : i32 to vector<1x128xi32>
    %21 = arith.addi %10, %20 : vector<1x128xi32>
    %22 = arith.select %19, %21, %10 : vector<1x128xi1>, vector<1x128xi32>
    %c31_i32 = arith.constant 31 : i32
    %23 = vector.broadcast %c31_i32 : i32 to vector<1x128xi32>
    %24 = arith.cmpi slt, %22, %23 : vector<1x128xi32>
    %25 = math.sin %5 : vector<2x128xf32>
    %26 = vector.shape_cast %24 : vector<1x128xi1> to vector<1x128xi1>
    %27 = vector.broadcast %26 : vector<1x128xi1> to vector<2x128xi1>
    %28 = arith.select %27, %25, %5 : vector<2x128xi1>, vector<2x128xf32>
    %c0_8 = arith.constant 0 : index
    %c0_9 = arith.constant 0 : index
    %29 = vector.load %arg4[%c0_8, %c0_9] : memref<2x128xf32, #tpu.memory_space<vmem>>, vector<2x128xf32>
    tpu.vector_store %arg4[%c0_8, %c0_9], %28 {strides = array<i32>} : memref<2x128xf32, #tpu.memory_space<vmem>>, vector<2x128xf32>,
    return
  }
  func.func @transform_0(%arg0: i32) -> (i32, i32) {
    %c0_i32 = arith.constant 0 : i32
    %c0_i32_0 = arith.constant 0 : i32
    return %arg0, %c0_i32 : i32, i32
  }
  func.func @transform_1(%arg0: i32) -> (i32, i32) {
    %c0_i32 = arith.constant 0 : i32
    %c0_i32_0 = arith.constant 0 : i32
    %c0_i32_1 = arith.constant 0 : i32
    return %c0_i32, %c0_i32_0 : i32, i32
  }
  func.func @transform_2(%arg0: i32) -> (i32, i32) {
    %c0_i32 = arith.constant 0 : i32
    %c0_i32_0 = arith.constant 0 : i32
    %c0_i32_1 = arith.constant 0 : i32
    return %c0_i32, %c0_i32_0 : i32, i32
  }
  func.func @transform_3(%arg0: i32) -> (i32, i32) {
    %c0_i32 = arith.constant 0 : i32
    %c0_i32_0 = arith.constant 0 : i32
    return %arg0, %c0_i32 : i32, i32
  }
}

</mosaic_0001>

<llo_original>
// kernel: tpu_custom_call.1
$region0: #{tpu_custom_call.1}
  #allocation0 [shape = 'u32[]', space=smem, size = 0x4, offset = 0x4, fixed_abs, tag = 'smem constant byte address 0x4 - core index']
  #allocation1 [shape = 'u32[144,128]{1,0:T(1,128)}', space=vmem, size = 0x12000, scoped, tag = 'internal scratch']
  %s0 = inlined_call_operand.hbm [shape: f32[2,4], index: 0, kind: input, shape index: {}]
  %s1 = inlined_call_operand.hbm [shape: f32[4,128], index: 1, kind: input, shape index: {}]
  %s2 = inlined_call_operand.vmem [shape: f32[1,128], index: 2, kind: input, shape index: {}]
  %s3 = inlined_call_operand.hbm [shape: f32[2,128], index: 3, kind: output, shape index: {}]
  %s4 = sld [smem:[#allocation0]]
  $region30: #{tpu_custom_call.1} parent=0
    _
  %s6 = ssub.s32 1, %s4
  %s7 = scalar_select 0, %s6, %s4
  $region1: #{tpu_custom_call.1} parent=0
    #allocation2 [shape = 'u8[1024]{0}', space=vmem, size = 0x400, scoped, tag = 'input window, operand 0, single buffered']
    #allocation3 [shape = 's32[1]{0}', space=sflag, size = 0x4, scoped, tag = 'scoped memory for tpu_custom_call.1']
    #allocation4 [shape = 's32[1]{0}', space=sflag, size = 0x4, scoped, tag = 'scoped memory for tpu_custom_call.1']
    #allocation5 [shape = 'u8[2048]{0}', space=vmem, size = 0x800, scoped, tag = 'input window, operand 1, single buffered']
    #allocation6 [shape = 's32[1]{0}', space=sflag, size = 0x4, scoped, tag = 'scoped memory for tpu_custom_call.1']
    #allocation7 [shape = 'u8[1024]{0}', space=vmem, size = 0x400, scoped, tag = 'output window, operand 0, single buffered']
    %8 = vsyncpa [#allocation3], 0
    %9 = vsyncpa [#allocation6], 0
    %10 = vsyncpa [#allocation4], 0
    // Predicated region
    $region2: #{tpu_custom_call.1} parent=1 // pred_check
      _
    $region3: #{tpu_custom_call.1} parent=1 // pred_check_branch
      %12 = sbr.rel (0) target = $region5
    $region4: #{tpu_custom_call.1} parent=1 // pred_region
      %s14 = ssub.s32 32, 32
      %15 = vsyncadd [#allocation3], %s14
      %s17 = sshll.u32 [#allocation2], 4
      %s18 = int_to_ptr.vmem [resolvable:$true] %s17
      %20 = dma.hbm_to_vmem [thread:$0]  %s0, 32, %s18, [#allocation3]
    $region5: #{tpu_custom_call.1} parent=1 // pred_fallthru
      _
    // Predicated region
    $region6: #{tpu_custom_call.1} parent=1 // pred_check
      _
    $region7: #{tpu_custom_call.1} parent=1 // pred_check_branch
      %22 = sbr.rel (0) target = $region9
    $region8: #{tpu_custom_call.1} parent=1 // pred_region
      %s24 = ssub.s32 64, 64
      %25 = vsyncadd [#allocation6], %s24
      %s27 = sshll.u32 [#allocation5], 4
      %s28 = int_to_ptr.vmem [resolvable:$true] %s27
      %30 = dma.hbm_to_vmem [thread:$0]  %s1, 64, %s28, [#allocation6]
    $region9: #{tpu_custom_call.1} parent=1 // pred_fallthru
      _
    // Predicated region
    $region10: #{tpu_custom_call.1} parent=1 // pred_check
      _
    $region11: #{tpu_custom_call.1} parent=1 // pred_check_branch
      %32 = sbr.rel (0) target = $region13
    $region12: #{tpu_custom_call.1} parent=1 // pred_region
      _
    $region13: #{tpu_custom_call.1} parent=1 // pred_fallthru
      _
    // Predicated region
    $region14: #{tpu_custom_call.1} parent=1 // pred_check
      _
    $region15: #{tpu_custom_call.1} parent=1 // pred_check_branch
      %34 = sbr.rel (0) target = $region17
    $region16: #{tpu_custom_call.1} parent=1 // pred_region
      %35 = dma.done [#allocation3], 32
    $region17: #{tpu_custom_call.1} parent=1 // pred_fallthru
      _
    // Predicated region
    $region18: #{tpu_custom_call.1} parent=1 // pred_check
      _
    $region19: #{tpu_custom_call.1} parent=1 // pred_check_branch
      %37 = sbr.rel (0) target = $region21
    $region20: #{tpu_custom_call.1} parent=1 // pred_region
      %38 = dma.done [#allocation6], 64
    $region21: #{tpu_custom_call.1} parent=1 // pred_fallthru
      _
    %v39 = vld [vmem:[#allocation2] sm:$0x3]
    %v40 = vld [vmem:[#allocation5] sm:$0xf]
    %v41 = vld [vmem:[%s2] sm:$0x1]
    %v43 = vlaneseq
    %v44 = vshrl.u32 %v43, 7
    %v45 = vsub.s32 0, %v44
    %v46 = vrot.slane %v41, %v45
    %vm48 = vcmask 31744
    %v50 = vsel %vm48, %v39, 0
    %vm52 = vcmask 1043456
    %v54 = vsel %vm52, %v40, 0
    %56 = vmatprep.subr.mxu0 0.0
    %57 = vmatpush1.msra.mxu0 %v54
    %58 = vmatprep.subr.mxu0 0.0
    %59 = vmatpush1.msra.mxu0 0.0
    %60 = vmatprep.subr.mxu0 0.0
    %61 = vmatpush1.msra.mxu0 0.0
    %62 = vmatprep.subr.mxu0 0.0
    %63 = vmatpush1.msra.mxu0 0.0
    %64 = vmatprep.subr.mxu0 0.0
    %65 = vmatpush1.msra.mxu0 0.0
    %66 = vmatprep.subr.mxu0 0.0
    %67 = vmatpush1.msra.mxu0 0.0
    %68 = vmatprep.subr.mxu0 0.0
    %69 = vmatpush1.msra.mxu0 0.0
    %70 = vmatprep.subr.mxu0 0.0
    %71 = vmatpush1.msra.mxu0 0.0
    %72 = vmatprep.subr.mxu0 0.0
    %73 = vmatpush1.msra.mxu0 0.0
    %74 = vmatprep.subr.mxu0 0.0
    %75 = vmatpush1.msra.mxu0 0.0
    %76 = vmatprep.subr.mxu0 0.0
    %77 = vmatpush1.msra.mxu0 0.0
    %78 = vmatprep.subr.mxu0 0.0
    %79 = vmatpush1.msra.mxu0 0.0
    %80 = vmatprep.subr.mxu0 0.0
    %81 = vmatpush1.msra.mxu0 0.0
    %82 = vmatprep.subr.mxu0 0.0
    %83 = vmatpush1.msra.mxu0 0.0
    %84 = vmatprep.subr.mxu0 0.0
    %85 = vmatpush1.msra.mxu0 0.0
    %86 = vmatprep.subr.mxu0 0.0
    %87 = vmatpush1.msra.mxu0 0.0
    %88 = vmatprep.subr.mxu0 0.0
    %89 = vmatpush1.msra.mxu0 0.0
    %90 = vmatprep.subr.mxu0 0.0
    %91 = vmatpush1.msra.mxu0 0.0
    %92 = vmatprep.subr.mxu0 0.0
    %93 = vmatpush1.msra.mxu0 0.0
    %94 = vmatprep.subr.mxu0 0.0
    %95 = vmatpush1.msra.mxu0 0.0
    %96 = vmatprep.subr.mxu0 0.0
    %97 = vmatpush1.msra.mxu0 0.0
    %98 = vmatprep.subr.mxu0 0.0
    %99 = vmatpush1.msra.mxu0 0.0
    %100 = vmatprep.subr.mxu0 0.0
    %101 = vmatpush1.msra.mxu0 0.0
    %102 = vmatprep.subr.mxu0 0.0
    %103 = vmatpush1.msra.mxu0 0.0
    %104 = vmatprep.subr.mxu0 0.0
    %105 = vmatpush1.msra.mxu0 0.0
    %106 = vmatprep.subr.mxu0 0.0
    %107 = vmatpush1.msra.mxu0 0.0
    %108 = vmatprep.subr.mxu0 0.0
    %109 = vmatpush1.msra.mxu0 0.0
    %110 = vmatprep.subr.mxu0 0.0
    %111 = vmatpush1.msra.mxu0 0.0
    %112 = vmatprep.subr.mxu0 0.0
    %113 = vmatpush1.msra.mxu0 0.0
    %114 = vmatprep.subr.mxu0 0.0
    %115 = vmatpush1.msra.mxu0 0.0
    %116 = vmatprep.subr.mxu0 0.0
    %117 = vmatpush1.msra.mxu0 0.0
    %118 = vmatprep.subr.mxu0 0.0
    %119 = vmatpush1.msra.mxu0 0.0
    %120 = vmatprep.mubr.f32.mxu0 0.0
    %121 = vmatmul.mubr.f32.gmra.mrb[0].mxu0 %v50
    %v122 = vpop.f32.mrb[0].mxu0
    %v123 = vadd.f32 %v46, %v122
    %v124 = vpop.f32.mrb[0].mxu0
    %125 = vdwg.mxu0
    %v126 = vlaneseq
    %v127 = vand.u32 %v126, 127
    %vm128 = vcmp.lt.s32.totalorder %v127, 0
    %v129 = vsub.s32 0, %v127
    %v130 = vsel %vm128, %v129, %v127
    %v131 = vshrl.u32 %v130, 5
    %v132 = vand.u32 %v130, 31
    %v133 = vsub.s32 0, %v132
    %v134 = vsel %vm128, %v133, %v132
    %vm135 = vcmp.ne.s32.totalorder %v134, 0
    %vm136 = vcmp.lt.s32.totalorder %v134, 0
    %vm137 = vmand %vm136, %vm135
    %v138 = vadd.s32 %v134, 32
    %v139 = vsel %vm137, %v138, %v134
    %vm140 = vcmp.lt.s32.totalorder %v139, 31
    %v141 = vand.u32 2147483647, %v123
    %vm142 = vcmp.le.f32.partialorder %v141, 0.7853982
    %vm143 = vcmp.lt.s32.totalorder %v123, 0
    %v144 = vand.u32 %v123, 2139095040
    %v145 = vshrl.u32 %v144, 23
    %v146 = vsub.s32 %v145, 127
    %v147 = vand.u32 2147483647, %v123
    %v148 = vand.u32 %v147, 8388607
    %v149 = vor.u32 %v148, 8388608
    %v150 = vsub.s32 0, %v149
    %v151 = vadd.s32 %v146, 1
    %vm152 = vcmp.gt.s32.totalorder %v151, 0
    %v153 = vsel %vm152, %v151, 0
    %v154 = vshrl.u32 %v153, 5
    %v155 = vand.u32 %v153, 31
    %v156 = vsub.s32 32, %v155
    %v157 = vshrl.u32 683565275, %v156
    %v158 = vshll.u32 683565275, %v155
    %v159 = vshrl.u32 2475754826, %v156
    %v160 = vor.u32 %v158, %v159
    %v161 = vshll.u32 2475754826, %v155
    %v162 = vshrl.u32 2131351028, %v156
    %v163 = vor.u32 %v161, %v162
    %v164 = vshll.u32 2131351028, %v155
    %v165 = vshrl.u32 2102212464, %v156
    %v166 = vor.u32 %v164, %v165
    %v167 = vshll.u32 2102212464, %v155
    %v168 = vshrl.u32 920167782, %v156
    %v169 = vor.u32 %v167, %v168
    %v170 = vshll.u32 920167782, %v155
    %v171 = vshrl.u32 1326507024, %v156
    %v172 = vor.u32 %v170, %v171
    %vm173 = vcmp.lt.s32.totalorder %v154, 1
    %vm174 = vcmp.lt.s32.totalorder %v154, 2
    %vm175 = vcmp.lt.s32.totalorder %v154, 3
    %vm176 = vcmp.lt.s32.totalorder %v154, 4
    %v177 = vsel %vm173, %v157, %v160
    %v178 = vsel %vm176, %v166, 2102212464
    %v179 = vsel %vm175, %v163, %v178
    %v180 = vsel %vm174, %v177, %v179
    %v181 = vsel %vm173, %v160, %v163
    %v182 = vsel %vm176, %v169, 920167782
    %v183 = vsel %vm175, %v166, %v182
    %v184 = vsel %vm174, %v181, %v183
    %v185 = vsel %vm173, %v163, %v166
    %v186 = vsel %vm176, %v172, 1326507024
    %v187 = vsel %vm175, %v169, %v186
    %v188 = vsel %vm174, %v185, %v187
    %v189 = vshll.u32 %v149, 8
    %v190 = vmul.u32.u64.compose %v189, %v188
    %v191 = vextract.low.u32 %v190
    %v192 = vextract.high.u32 %v190
    %v193 = vmul.u32.u64.compose %v189, %v184
    %v194 = vextract.low.u32 %v193
    %v195 = vextract.high.u32 %v193
    %v196 = vmul.u32 %v189, %v180
    %v197 = vadd.s32 %v192, %v194
    %vm198 = vc.u32 %v192, %v194
    %v199 = vadd.s32 %v195, 1
    %v200 = vsel %vm198, %v199, %v195
    %v201 = vadd.s32 %v196, %v200
    %v202 = vadd.s32 %v201, 536870912
    %v203 = vshrl.u32 %v202, 30
    %v204 = vshll.u32 %v203, 30
    %v205 = vsub.s32 %v201, %v204
    %vm206 = vcmp.lt.s32.totalorder %v205, 0
    %v207 = vsub.s32 0, %v205
    %v208 = vsel %vm206, %v207, %v205
    %v209 = vclz %v208
    %v210 = vsub.s32 %v209, 2
    %vm211 = vcmp.gt.s32.totalorder 0, %v210
    %v212 = vsel %vm211, 0, %v210
    %v213 = vsub.s32 32, %v212
    %v214 = vshll.u32 %v205, %v212
    %v215 = vshrl.u32 %v197, %v213
    %v216 = vor.u32 %v214, %v215
    %v217 = vsub.s32 4294967266, %v212
    %v218 = vadd.s32 %v217, 127
    %v219 = vshll.u32 %v218, 23
    %v220 = vor.u32 4788187, %v219
    %v221 = vand.u32 2147483647, %v220
    %v223 = vcvt.s32.f32 %v216
    %v224 = vmul.f32 %v223, %v221
    %v225 = vxor.u32 %v224, 2147483648
    %v226 = vsel %vm143, %v225, %v224
    %v227 = vsub.s32 4, %v203
    %v228 = vsel %vm143, %v227, %v203
    %v229 = vsel %vm142, %v123, %v226
    %v230 = vsel %vm142, 0, %v228
    %v231 = vcosq.f32.pop %v229
    %v232 = vsinq.f32.pop %v229
    %vm233 = vweird.f32 %v123
    %v234 = vadd.s32 %v230, 3
    %v235 = vand.u32 %v234, 3
    %vm236 = vcmp.lt.s32.totalorder %v235, 2
    %vm237 = vcmp.eq.s32.totalorder %v235, 0
    %v238 = vxor.u32 %v232, 2147483648
    %v239 = vsel %vm237, %v231, %v238
    %vm240 = vcmp.eq.s32.totalorder %v235, 2
    %v241 = vxor.u32 %v231, 2147483648
    %v242 = vsel %vm240, %v241, %v232
    %v243 = vsel %vm236, %v239, %v242
    %v244 = vsel %vm233, nan, %v243
    %v245 = vsel %vm140, 1, 0
    %vm246 = vcmp.eq.s32.totalorder %v245, 1
    %v247 = vsel %vm246, %v244, %v123
    %248 = vst [vmem:[#allocation7] sm:$0x3] %v247
    // Predicated region
    $region22: #{tpu_custom_call.1} parent=1 // pred_check
      _
    $region23: #{tpu_custom_call.1} parent=1 // pred_check_branch
      %250 = sbr.rel (0) target = $region25
    $region24: #{tpu_custom_call.1} parent=1 // pred_region
      %s252 = ssub.s32 32, 32
      %253 = vsyncadd [#allocation4], %s252
      %s255 = sshll.u32 [#allocation7], 4
      %s256 = int_to_ptr.vmem [resolvable:$true] %s255
      %258 = dma.vmem_to_hbm [thread:$0]  %s256, 32, %s3, [#allocation4]
    $region25: #{tpu_custom_call.1} parent=1 // pred_fallthru
      _
    // Predicated region
    $region26: #{tpu_custom_call.1} parent=1 // pred_check
      _
    $region27: #{tpu_custom_call.1} parent=1 // pred_check_branch
      %260 = sbr.rel (0) target = $region29
    $region28: #{tpu_custom_call.1} parent=1 // pred_region
      %261 = dma.done [#allocation4], 32
    $region29: #{tpu_custom_call.1} parent=1 // pred_fallthru
      _
    %262 = vsyncpa [#allocation3], 1
    %263 = vsyncpa [#allocation6], 1
    %264 = vsyncpa [#allocation4], 1

</llo_original>
